<compile_context>
chip_gen: v5e
topology: v5e:2x2
jax: 0.10.0
libtpu: 0.0.40
codegen_flags: <defaults>
</compile_context>

<pallas_src>
import math

import jax
import jax.numpy as jnp
from jax import lax
from jax.experimental import pallas as pl
from jax.experimental.pallas import tpu as pltpu


def fused_copy_task_kernel(mt_ref, vb_ref, x_ref, oT_ref):
    # oT (m, tile) = MT (m, in_f) ·(contract in_f)· x (tile, in_f)  +  Vb (m, 1)
    # Contraction on the trailing axis of both operands ("A @ B.T" form) keeps
    # the natural row-major x layout while producing a lane-dense (m, tile)
    # result (B*T on the 128-lane axis of the stores).
    acc = lax.dot_general(
        mt_ref[...],
        x_ref[...],
        dimension_numbers=(((1,), (1,)), ((), ())),
        preferred_element_type=jnp.float32,
    )
    oT_ref[...] = (acc + vb_ref[...]).astype(oT_ref.dtype)


def model_forward(inputs, W, Vw, Vb, *, tile_n=65536, stream_dtype=jnp.float32):
    """inputs: (B, T, m+1) f32 -> (B, T, m) f32"""
    B, T, in_f = inputs.shape
    k, in_f_w = W.shape
    m, k_v = Vw.shape
    assert in_f == in_f_w and k == k_v

    N = B * T

    # Collapse the two bias-free linears (valid: no nonlinearity/bias between
    # them):  out.T = (Vw @ W) @ x.T + Vb[:, None].  MT is kernel-ready.
    MT = jnp.dot(Vw, W)                      # (m, in_f)  -- plain XLA, once
    vb_col = Vb.reshape(m, 1).astype(jnp.float32)

    # Natural, un-transposed activation stream: (N, in_f).
    x2d = inputs.reshape(N, in_f)
    if stream_dtype != x2d.dtype:
        x2d = x2d.astype(stream_dtype)
        MT = MT.astype(stream_dtype)

    # ---- Tile selection -----------------------------------------------------
    # Big tiles amortize the ~0.35us fixed per-grid-step overhead.  For large
    # problems that would otherwise be a single step, split >=2 ways so dual-TC
    # chips (v7x) can shard the "parallel" N axis.  Tiles are multiples of 128
    # whenever they are not the full extent (lane-dense, (8,128)-rule safe).
    tile = min(tile_n, N)
    if N > 16384 and pl.cdiv(N, tile) < 2:
        tile = min(tile_n, ((N + 255) // 256) * 128)   # ~N/2, rounded to 128
    n_tiles = pl.cdiv(N, tile)

    # ---- VMEM budget / cost hint --------------------------------------------
    x_bytes = jnp.dtype(x2d.dtype).itemsize
    needed = 2 * tile * in_f * x_bytes + 2 * tile * m * 4 + (m * in_f + m) * 4
    vmem_limit = int(min(max(needed + (8 << 20), 32 << 20), 48 << 20))

    cost = pl.CostEstimate(
        flops=2 * N * in_f * m,
        transcendentals=0,
        bytes_accessed=N * in_f * x_bytes + N * m * 4 + m * in_f * x_bytes + m * 4,
    )

    # Ragged last block (when N % tile != 0) is handled by Pallas directly:
    # padded reads of the x block (garbage only feeds masked-out columns) and
    # masked writes of the output block.  No jnp.pad / extra HBM pass.
    outT = pl.pallas_call(
        fused_copy_task_kernel,
        out_shape=jax.ShapeDtypeStruct((m, N), jnp.float32),
        grid=(n_tiles,),
        in_specs=[
            pl.BlockSpec((m, in_f), lambda i: (0, 0)),     # combined weight, resident
            pl.BlockSpec((m, 1), lambda i: (0, 0)),        # bias, resident
            pl.BlockSpec((tile, in_f), lambda i: (i, 0)),  # natural-layout x tile
        ],
        out_specs=pl.BlockSpec((m, tile), lambda i: (0, i)),  # lane-dense store
        compiler_params=pltpu.CompilerParams(
            dimension_semantics=("parallel",),
            vmem_limit_bytes=vmem_limit,
        ),
        cost_estimate=cost,
    )(MT, vb_col, x2d)

    # The module's interface is (B, T, m); a consumer that accepts (m, N)
    # could skip this relayout entirely (kept lane-dense inside the kernel
    # on purpose -- writing (tile, m) blocks would make every store a masked
    # 8/128-lane vst).
    return outT.T.reshape(B, T, m)


def init_params(key, m, k):
    """Deterministic init matching the PyTorch module's __init__ distributions."""
    k1, k2, k3 = jax.random.split(key, 3)
    in_features = m + 1
    # MLP: W = -2*bound*rand(out,in) + bound, bound = sqrt(1/in_features)
    bound_mlp = math.sqrt(1.0 / in_features)
    W = jax.random.uniform(
        k1, (k, in_features), jnp.float32, minval=-bound_mlp, maxval=bound_mlp
    )
    # nn.Linear(k, m): U(-1/sqrt(k), 1/sqrt(k)) for weight and bias
    bound_v = 1.0 / math.sqrt(k)
    Vw = jax.random.uniform(k2, (m, k), jnp.float32, minval=-bound_v, maxval=bound_v)
    Vb = jax.random.uniform(k3, (m,), jnp.float32, minval=-bound_v, maxval=bound_v)
    return W, Vw, Vb


def reference_forward(inputs, W, Vw, Vb):
    """Pure-JAX reference: batched form of the PyTorch per-timestep loop
    (state_t = x_t @ W.T ; out_t = state_t @ Vw.T + Vb), mathematically
    identical since each timestep is an independent matmul."""
    state = jnp.einsum("bti,ki->btk", inputs, W)
    return jnp.einsum("btk,mk->btm", state, Vw) + Vb


if __name__ == "__main__":
    # Small shapes consistent with the module: m=8 symbols, k=32 hidden.
    m, k = 8, 32

    key = jax.random.PRNGKey(0)
    kx, kp, kx2 = jax.random.split(key, 3)
    W, Vw, Vb = init_params(kp, m, k)

    # --- Case 1: tiny (batch=2, seq=8) -> single full-extent block ----------
    B, T = 2, 8
    inputs = jax.random.normal(kx, (B, T, m + 1), dtype=jnp.float32)
    out = jax.block_until_ready(model_forward(inputs, W, Vw, Vb))
    ref = reference_forward(inputs, W, Vw, Vb)
    assert out.shape == (B, T, m), out.shape
    # Collapsing (x @ W.T) @ Vw.T -> x @ (Vw @ W).T reassociates the f32 sum;
    # differences are ~1e-6, well within this tolerance.
    assert jnp.allclose(out, ref, atol=1e-4, rtol=1e-4), float(
        jnp.max(jnp.abs(out - ref))
    )

    # --- Case 2: small multi-tile with a ragged last block ------------------
    # Exercises the padded-read / masked-write path (N = 1200, tile = 256).
    B2, T2 = 4, 300
    inputs2 = jax.random.normal(kx2, (B2, T2, m + 1), dtype=jnp.float32)
    out2 = jax.block_until_ready(model_forward(inputs2, W, Vw, Vb, tile_n=256))
    ref2 = reference_forward(inputs2, W, Vw, Vb)
    assert out2.shape == (B2, T2, m), out2.shape
    assert jnp.allclose(out2, ref2, atol=1e-4, rtol=1e-4), float(
        jnp.max(jnp.abs(out2 - ref2))
    )

    print("KERNEL_OK")
</pallas_src>

<mosaic_0001>
module attributes {stable_mosaic.version = 11 : i64} {
  func.func @fused_copy_task_kernel(%arg0: i32, %arg1: memref<8x9xf32, #tpu.memory_space<vmem>>, %arg2: memref<8x1xf32, #tpu.memory_space<vmem>>, %arg3: memref<16x9xf32, #tpu.memory_space<vmem>>, %arg4: memref<8x16xf32, #tpu.memory_space<vmem>>) attributes {dimension_semantics = [#tpu.dimension_semantics<parallel>], iteration_bounds = array<i64: 1>, scalar_prefetch = 0 : i64, scratch_operands = 0 : i64, tpu.core_type = #tpu.core_type<tc>, window_params = [{pipeline_mode = #tpu.pipeline_mode<synchronous>, transform_indices = @transform_0, window_bounds = array<i64: 8, 9>}, {pipeline_mode = #tpu.pipeline_mode<synchronous>, transform_indices = @transform_1, window_bounds = array<i64: 8, 1>}, {transform_indices = @transform_2, window_bounds = array<i64: 16, 9>}, {transform_indices = @transform_3, window_bounds = array<i64: 8, 16>}]} {
    %c0 = arith.constant 0 : index
    %c0_0 = arith.constant 0 : index
    %0 = vector.load %arg1[%c0, %c0_0] : memref<8x9xf32, #tpu.memory_space<vmem>>, vector<8x9xf32>
    %c0_1 = arith.constant 0 : index
    %c0_2 = arith.constant 0 : index
    %1 = vector.load %arg3[%c0_1, %c0_2] : memref<16x9xf32, #tpu.memory_space<vmem>>, vector<16x9xf32>
    %cst = arith.constant dense<0.000000e+00> : vector<8x16xf32>
    %2 = tpu.matmul %0, %1, %cst {dimension_numbers = #tpu.dot_dimension_numbers<[1], [1], [0], [0], [0, 0, 1, 0], [], []>} : vector<8x9xf32>, vector<16x9xf32>, vector<8x16xf32> -> vector<8x16xf32>
    %c0_3 = arith.constant 0 : index
    %c0_4 = arith.constant 0 : index
    %3 = vector.load %arg2[%c0_3, %c0_4] : memref<8x1xf32, #tpu.memory_space<vmem>>, vector<8x1xf32>
    %4 = vector.broadcast %3 : vector<8x1xf32> to vector<8x16xf32>
    %5 = arith.addf %2, %4 : vector<8x16xf32>
    %c0_5 = arith.constant 0 : index
    %c0_6 = arith.constant 0 : index
    %6 = vector.load %arg4[%c0_5, %c0_6] : memref<8x16xf32, #tpu.memory_space<vmem>>, vector<8x16xf32>
    tpu.vector_store %arg4[%c0_5, %c0_6], %5 {strides = array<i32>} : memref<8x16xf32, #tpu.memory_space<vmem>>, vector<8x16xf32>,
    return
  }
  func.func @transform_0(%arg0: i32) -> (i32, i32) {
    %c0_i32 = arith.constant 0 : i32
    %c0_i32_0 = arith.constant 0 : i32
    %c0_i32_1 = arith.constant 0 : i32
    return %c0_i32, %c0_i32_0 : i32, i32
  }
  func.func @transform_1(%arg0: i32) -> (i32, i32) {
    %c0_i32 = arith.constant 0 : i32
    %c0_i32_0 = arith.constant 0 : i32
    %c0_i32_1 = arith.constant 0 : i32
    return %c0_i32, %c0_i32_0 : i32, i32
  }
  func.func @transform_2(%arg0: i32) -> (i32, i32) {
    %c0_i32 = arith.constant 0 : i32
    %c0_i32_0 = arith.constant 0 : i32
    return %arg0, %c0_i32 : i32, i32
  }
  func.func @transform_3(%arg0: i32) -> (i32, i32) {
    %c0_i32 = arith.constant 0 : i32
    %c0_i32_0 = arith.constant 0 : i32
    return %c0_i32, %arg0 : i32, i32
  }
}

</mosaic_0001>

<llo_original>
// kernel: tpu_custom_call.1
$region0: #{tpu_custom_call.1}
  #allocation0 [shape = 'u32[]', space=smem, size = 0x4, offset = 0x4, fixed_abs, tag = 'smem constant byte address 0x4 - core index']
  #allocation1 [shape = 'u32[72,128]{1,0:T(1,128)}', space=vmem, size = 0x9000, scoped, tag = 'internal scratch']
  %s0 = inlined_call_operand.vmem [shape: f32[8,9], index: 0, kind: input, shape index: {}]
  %s1 = inlined_call_operand.vmem [shape: f32[8,1], index: 1, kind: input, shape index: {}]
  %s2 = inlined_call_operand.hbm [shape: f32[16,9], index: 2, kind: input, shape index: {}]
  %s3 = inlined_call_operand.hbm [shape: f32[8,16], index: 3, kind: output, shape index: {}]
  %s4 = sld [smem:[#allocation0]]
  $region26: #{tpu_custom_call.1} parent=0
    _
  %s6 = ssub.s32 1, %s4
  %s7 = scalar_select 0, %s6, %s4
  $region1: #{tpu_custom_call.1} parent=0
    #allocation2 [shape = 'u8[8192]{0}', space=vmem, size = 0x2000, scoped, tag = 'input window, operand 2, single buffered']
    #allocation3 [shape = 's32[1]{0}', space=sflag, size = 0x4, scoped, tag = 'scoped memory for tpu_custom_call.1']
    #allocation4 [shape = 's32[1]{0}', space=sflag, size = 0x4, scoped, tag = 'scoped memory for tpu_custom_call.1']
    #allocation5 [shape = 'u8[4096]{0}', space=vmem, size = 0x1000, scoped, tag = 'output window, operand 0, single buffered']
    %8 = vsyncpa [#allocation3], 0
    %9 = vsyncpa [#allocation4], 0
    // Predicated region
    $region2: #{tpu_custom_call.1} parent=1 // pred_check
      _
    $region3: #{tpu_custom_call.1} parent=1 // pred_check_branch
      %11 = sbr.rel (0) target = $region5
    $region4: #{tpu_custom_call.1} parent=1 // pred_region
      _
    $region5: #{tpu_custom_call.1} parent=1 // pred_fallthru
      _
    // Predicated region
    $region6: #{tpu_custom_call.1} parent=1 // pred_check
      _
    $region7: #{tpu_custom_call.1} parent=1 // pred_check_branch
      %13 = sbr.rel (0) target = $region9
    $region8: #{tpu_custom_call.1} parent=1 // pred_region
      _
    $region9: #{tpu_custom_call.1} parent=1 // pred_fallthru
      _
    // Predicated region
    $region10: #{tpu_custom_call.1} parent=1 // pred_check
      _
    $region11: #{tpu_custom_call.1} parent=1 // pred_check_branch
      %15 = sbr.rel (0) target = $region13
    $region12: #{tpu_custom_call.1} parent=1 // pred_region
      %17 = vsyncadd [#allocation3], 0
      %s18 = sshll.u32 %s2, 4
      %s19 = int_to_ptr.hbm [resolvable:$true] %s18
      %s20 = sshll.u32 [#allocation2], 4
      %s21 = int_to_ptr.vmem [resolvable:$true] %s20
      %26 = dma.hbm_to_vmem [thread:$0]  %s19, 256, %s21, [#allocation3], 128, 128, 8
    $region13: #{tpu_custom_call.1} parent=1 // pred_fallthru
      _
    // Predicated region
    $region14: #{tpu_custom_call.1} parent=1 // pred_check
      _
    $region15: #{tpu_custom_call.1} parent=1 // pred_check_branch
      %28 = sbr.rel (0) target = $region17
    $region16: #{tpu_custom_call.1} parent=1 // pred_region
      %30 = dma.done [#allocation3], 256
    $region17: #{tpu_custom_call.1} parent=1 // pred_fallthru
      _
    %v31 = vld [vmem:[%s0] sm:$0xff]
    %v32 = vld [vmem:[#allocation2] sm:$0xff]
    %v33 = vld [vmem:[#allocation2 + $0x8] sm:$0xff]
    %v34 = vld [vmem:[%s1] sm:$0xff]
    %36 = vset.pattern.permute.xlu0 0
    %37 = vperm.xlu0 %36, %v34
    %v38 = vpop.permute.xlu0 %37
    %vm40 = vcmask 72704
    %v42 = vsel %vm40, %v31, 0
    %v45 = vsel %vm40, %v32, 0
    %v48 = vsel %vm40, %v33, 0
    %50 = vmatpush.xpose.msra.mxu0 0.0
    %51 = vmatpush.xpose.msra.mxu0 0.0
    %52 = vmatpush.xpose.msra.mxu0 0.0
    %53 = vmatpush.xpose.msra.mxu0 0.0
    %54 = vmatpush.xpose.msra.mxu0 0.0
    %55 = vmatpush.xpose.msra.mxu0 0.0
    %56 = vmatpush.xpose.msra.mxu0 0.0
    %57 = vmatpush.xpose.msra.mxu0 0.0
    %58 = vmatpush.xpose.msra.mxu0 0.0
    %59 = vmatpush.xpose.msra.mxu0 0.0
    %60 = vmatpush.xpose.msra.mxu0 0.0
    %61 = vmatpush.xpose.msra.mxu0 0.0
    %62 = vmatpush.xpose.msra.mxu0 0.0
    %63 = vmatpush.xpose.msra.mxu0 0.0
    %64 = vmatpush.xpose.msra.mxu0 %v48
    %65 = vmatpush.xpose.msra.mxu0 %v45
    %66 = vmatmul.f32.gmra.mxu0 %v42
    %v67 = vpop.f32.mrf.mxu0
    %v68 = vadd.f32 %v38, %v67
    %69 = vdwg.mxu0
    %vm70 = vcmask 130048
    %71 = vst.msk [vmem:[#allocation5] sm:$0xff] %vm70, %v68
    // Predicated region
    $region18: #{tpu_custom_call.1} parent=1 // pred_check
      _
    $region19: #{tpu_custom_call.1} parent=1 // pred_check_branch
      %73 = sbr.rel (0) target = $region21
    $region20: #{tpu_custom_call.1} parent=1 // pred_region
      %75 = vsyncadd [#allocation4], 0
      %s77 = sshll.u32 [#allocation5], 4
      %s78 = int_to_ptr.vmem [resolvable:$true] %s77
      %s79 = sshll.u32 %s3, 4
      %s80 = int_to_ptr.hbm [resolvable:$true] %s79
      %82 = dma.vmem_to_hbm [thread:$0]  %s78, 128, %s80, [#allocation4]
    $region21: #{tpu_custom_call.1} parent=1 // pred_fallthru
      _
    // Predicated region
    $region22: #{tpu_custom_call.1} parent=1 // pred_check
      _
    $region23: #{tpu_custom_call.1} parent=1 // pred_check_branch
      %84 = sbr.rel (0) target = $region25
    $region24: #{tpu_custom_call.1} parent=1 // pred_region
      %86 = dma.done [#allocation4], 128
    $region25: #{tpu_custom_call.1} parent=1 // pred_fallthru
      _
    %87 = vsyncpa [#allocation3], 1
    %88 = vsyncpa [#allocation4], 1

</llo_original>
